<compile_context>
chip_gen: v7x
topology: tpu7x:2x2x1
jax: 0.10.0
libtpu: 0.0.40
codegen_flags: <defaults>
</compile_context>

<pallas_src>
import jax
import jax.numpy as jnp
from jax.experimental import pallas as pl
from jax.experimental.pallas import tpu as pltpu


def _dice_loss_kernel(out_ref, tgt_ref, loss_ref, inter_acc, union_acc):
    # out_ref, tgt_ref: (N, TD) VMEM tiles; loss_ref: (1, 1) SMEM scalar.
    # inter_acc, union_acc: (N, 1) f32 VMEM accumulators (persist across grid).
    j = pl.program_id(0)

    @pl.when(j == 0)
    def _init():
        inter_acc[...] = jnp.zeros_like(inter_acc)
        union_acc[...] = jnp.zeros_like(union_acc)

    o = out_ref[...].astype(jnp.float32)
    t = tgt_ref[...].astype(jnp.float32)

    # Hot loop: one VPU multiply + two cross-lane reductions per tile.
    inter_acc[...] += jnp.sum(o * t, axis=1, keepdims=True)
    union_acc[...] += jnp.sum(o + t, axis=1, keepdims=True)

    @pl.when(j == pl.num_programs(0) - 1)
    def _finalize():
        # 2 * (1000 * inter) + 1  ==  2000 * inter + 1  (1000x folded here).
        ratio = (2000.0 * inter_acc[...] + 1.0) / (union_acc[...] + 1.0)
        loss_ref[0, 0] = 1.0 - jnp.mean(ratio)


def dice_loss(output, target):
    """output, target: (N, C, ...) arrays (any trailing spatial dims)."""
    assert output.shape == target.shape
    n = output.shape[0]
    out2d = output.reshape(n, -1)
    tgt2d = target.reshape(n, -1)
    d = out2d.shape[1]

    # --- Tile sizing: lane-aligned D tile targeting ~2 MiB per input tile. ---
    bytes_per_elem = 4  # accumulation / compute is in f32
    target_tile_bytes = 2 * 1024 * 1024
    td = max(128, (target_tile_bytes // (n * bytes_per_elem)) // 128 * 128)
    d_lane = -(-d // 128) * 128          # D rounded up to a lane multiple
    td = min(td, d_lane)
    d_pad = -(-d // td) * td             # pad D to a multiple of the tile

    if d_pad != d:
        # Zero padding is exact for these sums (intersection and union).
        pad_cfg = ((0, 0), (0, d_pad - d))
        out2d = jnp.pad(out2d, pad_cfg)
        tgt2d = jnp.pad(tgt2d, pad_cfg)

    grid = (d_pad // td,)

    # VMEM budget: 2 inputs x 2 pipeline buffers x tile (+ small scratch),
    # with headroom; capped to stay safe on v7x (64 MiB physical VMEM).
    tile_bytes = n * td * bytes_per_elem
    vmem_limit = min(max(4 * tile_bytes + (4 << 20), 16 << 20), 48 << 20)

    loss = pl.pallas_call(
        _dice_loss_kernel,
        out_shape=jax.ShapeDtypeStruct((1, 1), jnp.float32),
        grid_spec=pltpu.PrefetchScalarGridSpec(
            num_scalar_prefetch=0,
            grid=grid,
            in_specs=[
                pl.BlockSpec((n, td), lambda j: (0, j)),
                pl.BlockSpec((n, td), lambda j: (0, j)),
            ],
            out_specs=pl.BlockSpec(
                (1, 1), lambda j: (0, 0), memory_space=pltpu.MemorySpace.SMEM
            ),
            scratch_shapes=[
                pltpu.VMEM((n, 1), jnp.float32),  # intersection accumulator
                pltpu.VMEM((n, 1), jnp.float32),  # union accumulator
            ],
        ),
        compiler_params=pltpu.CompilerParams(
            dimension_semantics=("arbitrary",),  # D axis is a reduction
            vmem_limit_bytes=vmem_limit,
        ),
    )(out2d, tgt2d)
    return loss[0, 0]


def _dice_loss_ref(output, target):
    # Pure-JAX reference for correctness checking.
    n = output.shape[0]
    o = output.reshape(n, -1).astype(jnp.float32)
    t = target.reshape(n, -1).astype(jnp.float32)
    inter = jnp.sum(o * (t * 1000.0), axis=1)
    union = jnp.sum(o, axis=1) + jnp.sum(t, axis=1)
    return 1.0 - jnp.mean((2.0 * inter + 1.0) / (union + 1.0))


if __name__ == "__main__":
    key = jax.random.PRNGKey(0)
    k1, k2 = jax.random.split(key)

    # Small NCHW shapes: batch=2, channels=4, spatial=16x16.
    output = jax.nn.sigmoid(jax.random.normal(k1, (2, 4, 16, 16), jnp.float32))
    target = (jax.random.uniform(k2, (2, 4, 16, 16), jnp.float32) > 0.5).astype(
        jnp.float32
    )

    loss = jax.block_until_ready(dice_loss(output, target))
    ref = jax.block_until_ready(_dice_loss_ref(output, target))

    assert jnp.allclose(loss, ref, rtol=1e-5, atol=1e-5), (loss, ref)
    print("KERNEL_OK")
</pallas_src>

<mosaic_0001>
module attributes {stable_mosaic.version = 11 : i64} {
  func.func @_dice_loss_kernel(%arg0: i32, %arg1: memref<2x1024xf32, #tpu.memory_space<vmem>>, %arg2: memref<2x1024xf32, #tpu.memory_space<vmem>>, %arg3: memref<1x1xf32, #tpu.memory_space<smem>>, %arg4: memref<2x1xf32, #tpu.memory_space<vmem>>, %arg5: memref<2x1xf32, #tpu.memory_space<vmem>>) attributes {dimension_semantics = [#tpu.dimension_semantics<arbitrary>], iteration_bounds = array<i64: 1>, scalar_prefetch = 0 : i64, scratch_operands = 2 : i64, tpu.core_type = #tpu.core_type<tc>, window_params = [{transform_indices = @transform_0, window_bounds = array<i64: 2, 1024>}, {transform_indices = @transform_1, window_bounds = array<i64: 2, 1024>}, {transform_indices = @transform_2, window_bounds = array<i64: 1, 1>}]} {
    %c0_i32 = arith.constant 0 : i32
    %0 = arith.cmpi eq, %arg0, %c0_i32 : i32
    %1 = arith.extui %0 : i1 to i32
    %c0_i32_0 = arith.constant 0 : i32
    %2 = arith.cmpi ne, %1, %c0_i32_0 : i32
    scf.if %2 {
      %cst_15 = arith.constant 0.000000e+00 : f32
      %20 = vector.broadcast %cst_15 : f32 to vector<2x1xf32>
      %c0_16 = arith.constant 0 : index
      %c0_17 = arith.constant 0 : index
      %21 = vector.load %arg4[%c0_16, %c0_17] : memref<2x1xf32, #tpu.memory_space<vmem>>, vector<2x1xf32>
      tpu.vector_store %arg4[%c0_16, %c0_17], %20 {strides = array<i32>} : memref<2x1xf32, #tpu.memory_space<vmem>>, vector<2x1xf32>,
      %cst_18 = arith.constant 0.000000e+00 : f32
      %22 = vector.broadcast %cst_18 : f32 to vector<2x1xf32>
      %c0_19 = arith.constant 0 : index
      %c0_20 = arith.constant 0 : index
      %23 = vector.load %arg5[%c0_19, %c0_20] : memref<2x1xf32, #tpu.memory_space<vmem>>, vector<2x1xf32>
      tpu.vector_store %arg5[%c0_19, %c0_20], %22 {strides = array<i32>} : memref<2x1xf32, #tpu.memory_space<vmem>>, vector<2x1xf32>,
    } else {
    }
    %c0 = arith.constant 0 : index
    %c0_1 = arith.constant 0 : index
    %3 = vector.load %arg1[%c0, %c0_1] : memref<2x1024xf32, #tpu.memory_space<vmem>>, vector<2x1024xf32>
    %c0_2 = arith.constant 0 : index
    %c0_3 = arith.constant 0 : index
    %4 = vector.load %arg2[%c0_2, %c0_3] : memref<2x1024xf32, #tpu.memory_space<vmem>>, vector<2x1024xf32>
    %c0_4 = arith.constant 0 : index
    %c0_5 = arith.constant 0 : index
    %5 = vector.load %arg4[%c0_4, %c0_5] : memref<2x1xf32, #tpu.memory_space<vmem>>, vector<2x1xf32>
    %6 = arith.mulf %3, %4 : vector<2x1024xf32>
    %cst = arith.constant dense<0.000000e+00> : vector<2xf32>
    %7 = vector.multi_reduction <add>, %6, %cst [1] : vector<2x1024xf32> to vector<2xf32>
    %8 = vector.shape_cast %7 : vector<2xf32> to vector<2x1xf32>
    %9 = arith.addf %5, %8 : vector<2x1xf32>
    %c0_6 = arith.constant 0 : index
    %c0_7 = arith.constant 0 : index
    %10 = vector.load %arg4[%c0_6, %c0_7] : memref<2x1xf32, #tpu.memory_space<vmem>>, vector<2x1xf32>
    tpu.vector_store %arg4[%c0_6, %c0_7], %9 {strides = array<i32>} : memref<2x1xf32, #tpu.memory_space<vmem>>, vector<2x1xf32>,
    %c0_8 = arith.constant 0 : index
    %c0_9 = arith.constant 0 : index
    %11 = vector.load %arg5[%c0_8, %c0_9] : memref<2x1xf32, #tpu.memory_space<vmem>>, vector<2x1xf32>
    %12 = arith.addf %3, %4 : vector<2x1024xf32>
    %cst_10 = arith.constant dense<0.000000e+00> : vector<2xf32>
    %13 = vector.multi_reduction <add>, %12, %cst_10 [1] : vector<2x1024xf32> to vector<2xf32>
    %14 = vector.shape_cast %13 : vector<2xf32> to vector<2x1xf32>
    %15 = arith.addf %11, %14 : vector<2x1xf32>
    %c0_11 = arith.constant 0 : index
    %c0_12 = arith.constant 0 : index
    %16 = vector.load %arg5[%c0_11, %c0_12] : memref<2x1xf32, #tpu.memory_space<vmem>>, vector<2x1xf32>
    tpu.vector_store %arg5[%c0_11, %c0_12], %15 {strides = array<i32>} : memref<2x1xf32, #tpu.memory_space<vmem>>, vector<2x1xf32>,
    %c0_i32_13 = arith.constant 0 : i32
    %17 = arith.cmpi eq, %arg0, %c0_i32_13 : i32
    %18 = arith.extui %17 : i1 to i32
    %c0_i32_14 = arith.constant 0 : i32
    %19 = arith.cmpi ne, %18, %c0_i32_14 : i32
    scf.if %19 {
      %c0_15 = arith.constant 0 : index
      %c0_16 = arith.constant 0 : index
      %20 = vector.load %arg4[%c0_15, %c0_16] : memref<2x1xf32, #tpu.memory_space<vmem>>, vector<2x1xf32>
      %cst_17 = arith.constant 2.000000e+03 : f32
      %21 = vector.broadcast %cst_17 : f32 to vector<2x1xf32>
      %22 = arith.mulf %21, %20 : vector<2x1xf32>
      %cst_18 = arith.constant 1.000000e+00 : f32
      %23 = vector.broadcast %cst_18 : f32 to vector<2x1xf32>
      %24 = arith.addf %22, %23 : vector<2x1xf32>
      %c0_19 = arith.constant 0 : index
      %c0_20 = arith.constant 0 : index
      %25 = vector.load %arg5[%c0_19, %c0_20] : memref<2x1xf32, #tpu.memory_space<vmem>>, vector<2x1xf32>
      %cst_21 = arith.constant 1.000000e+00 : f32
      %26 = vector.broadcast %cst_21 : f32 to vector<2x1xf32>
      %27 = arith.addf %25, %26 : vector<2x1xf32>
      %28 = arith.divf %24, %27 : vector<2x1xf32>
      %29 = vector.shape_cast %28 : vector<2x1xf32> to vector<1x2x1xf32>
      %cst_22 = arith.constant dense<0.000000e+00> : vector<1xf32>
      %30 = vector.multi_reduction <add>, %29, %cst_22 [1, 2] : vector<1x2x1xf32> to vector<1xf32>
      %31 = vector.shape_cast %30 : vector<1xf32> to vector<1x1x1xf32>
      %32 = vector.extract %31[0, 0, 0] : f32 from vector<1x1x1xf32>
      %cst_23 = arith.constant 2.000000e+00 : f32
      %33 = arith.divf %32, %cst_23 : f32
      %cst_24 = arith.constant 1.000000e+00 : f32
      %34 = arith.subf %cst_24, %33 : f32
      %c0_25 = arith.constant 0 : index
      %c0_26 = arith.constant 0 : index
      %35 = memref.load %arg3[%c0_25, %c0_26] : memref<1x1xf32, #tpu.memory_space<smem>>
      memref.store %34, %arg3[%c0_25, %c0_26] : memref<1x1xf32, #tpu.memory_space<smem>>
    } else {
    }
    return
  }
  func.func @transform_0(%arg0: i32) -> (i32, i32) {
    %c0_i32 = arith.constant 0 : i32
    %c0_i32_0 = arith.constant 0 : i32
    return %c0_i32, %arg0 : i32, i32
  }
  func.func @transform_1(%arg0: i32) -> (i32, i32) {
    %c0_i32 = arith.constant 0 : i32
    %c0_i32_0 = arith.constant 0 : i32
    return %c0_i32, %arg0 : i32, i32
  }
  func.func @transform_2(%arg0: i32) -> (i32, i32) {
    %c0_i32 = arith.constant 0 : i32
    %c0_i32_0 = arith.constant 0 : i32
    %c0_i32_1 = arith.constant 0 : i32
    return %c0_i32, %c0_i32_0 : i32, i32
  }
}

</mosaic_0001>

<llo_original>
// kernel: tpu_custom_call.1
$region0: #{tpu_custom_call.1}
  #allocation0 [shape = 'u32[]', space=smem, size = 0x4, offset = 0x4, fixed_abs, tag = 'smem constant byte address 0x4 - core index']
  #allocation1 [shape = 'u32[144,128]{1,0:T(1,128)}', space=vmem, size = 0x12000, scoped, tag = 'internal scratch']
  #allocation2 [shape = 'f32[2,1]{1,0:T(2,128)}', space=vmem, size = 0x400, scoped, tag = 'scratch operand']
  #allocation3 [shape = 'f32[2,1]{1,0:T(2,128)}', space=vmem, size = 0x400, scoped, tag = 'scratch operand']
  %s0 = inlined_call_operand.hbm [shape: f32[2,1024], index: 0, kind: input, shape index: {}]
  %s1 = inlined_call_operand.hbm [shape: f32[2,1024], index: 1, kind: input, shape index: {}]
  %s2 = inlined_call_operand.hbm [shape: f32[1,1], index: 2, kind: output, shape index: {}]
  %s3 = sld [smem:[#allocation0]]
  $region34: #{tpu_custom_call.1} parent=0
    _
  %s5 = ssub.s32 1, %s3
  %s6 = scalar_select 0, %s5, %s3
  $region1: #{tpu_custom_call.1} parent=0
    #allocation4 [shape = 'u8[8192]{0}', space=vmem, size = 0x2000, scoped, tag = 'input window, operand 0, single buffered']
    #allocation5 [shape = 's32[1]{0}', space=sflag, size = 0x4, scoped, tag = 'scoped memory for tpu_custom_call.1']
    #allocation6 [shape = 's32[1]{0}', space=sflag, size = 0x4, scoped, tag = 'scoped memory for tpu_custom_call.1']
    #allocation7 [shape = 'u8[8192]{0}', space=vmem, size = 0x2000, scoped, tag = 'input window, operand 1, single buffered']
    #allocation8 [shape = 's32[1]{0}', space=sflag, size = 0x4, scoped, tag = 'scoped memory for tpu_custom_call.1']
    #allocation9 [shape = 'u8[512]{0}', space=smem, size = 0x200, scoped, tag = 'output window, operand 0, single buffered']
    %7 = vsyncpa [#allocation5], 0
    %8 = vsyncpa [#allocation8], 0
    %9 = vsyncpa [#allocation6], 0
    // Predicated region
    $region2: #{tpu_custom_call.1} parent=1 // pred_check
      _
    $region3: #{tpu_custom_call.1} parent=1 // pred_check_branch
      %11 = sbr.rel (0) target = $region5
    $region4: #{tpu_custom_call.1} parent=1 // pred_region
      %s13 = ssub.s32 256, 256
      %14 = vsyncadd [#allocation5], %s13
      %s16 = sshll.u32 [#allocation4], 4
      %s17 = int_to_ptr.vmem [resolvable:$true] %s16
      %19 = dma.hbm_to_vmem [thread:$0]  %s0, 256, %s17, [#allocation5]
    $region5: #{tpu_custom_call.1} parent=1 // pred_fallthru
      _
    // Predicated region
    $region6: #{tpu_custom_call.1} parent=1 // pred_check
      _
    $region7: #{tpu_custom_call.1} parent=1 // pred_check_branch
      %21 = sbr.rel (0) target = $region9
    $region8: #{tpu_custom_call.1} parent=1 // pred_region
      %s23 = ssub.s32 256, 256
      %24 = vsyncadd [#allocation8], %s23
      %s26 = sshll.u32 [#allocation7], 4
      %s27 = int_to_ptr.vmem [resolvable:$true] %s26
      %29 = dma.hbm_to_vmem [thread:$0]  %s1, 256, %s27, [#allocation8]
    $region9: #{tpu_custom_call.1} parent=1 // pred_fallthru
      _
    // Predicated region
    $region10: #{tpu_custom_call.1} parent=1 // pred_check
      _
    $region11: #{tpu_custom_call.1} parent=1 // pred_check_branch
      %31 = sbr.rel (0) target = $region13
    $region12: #{tpu_custom_call.1} parent=1 // pred_region
      %32 = dma.done [#allocation5], 256
    $region13: #{tpu_custom_call.1} parent=1 // pred_fallthru
      _
    // Predicated region
    $region14: #{tpu_custom_call.1} parent=1 // pred_check
      _
    $region15: #{tpu_custom_call.1} parent=1 // pred_check_branch
      %34 = sbr.rel (0) target = $region17
    $region16: #{tpu_custom_call.1} parent=1 // pred_region
      %35 = dma.done [#allocation8], 256
    $region17: #{tpu_custom_call.1} parent=1 // pred_fallthru
      _
    %p36 = scmp.eq.s32.totalorder 0, 0
    // Predicated region
    $region18: #{tpu_custom_call.1} parent=1 // pred_check
      %p37 = pneg %p36
    $region19: #{tpu_custom_call.1} parent=1 // pred_check_branch
      %39 = sbr.rel (%p37) target = $region21
    $region20: #{tpu_custom_call.1} parent=1 // pred_region
      %vm40 = vcmask 1024
      %41 = vst.msk [vmem:[#allocation2] sm:$0x3] %vm40, 0.0
      %42 = vst.msk [vmem:[#allocation3] sm:$0x3] %vm40, 0.0
    $region21: #{tpu_custom_call.1} parent=1 // pred_fallthru
      _
    %v43 = vld [vmem:[#allocation4] sm:$0xff]
    %v44 = vld [vmem:[#allocation4 + $0x8] sm:$0xff]
    %v45 = vld [vmem:[#allocation7] sm:$0xff]
    %v46 = vld [vmem:[#allocation7 + $0x8] sm:$0xff]
    %v47 = vld [vmem:[#allocation2] sm:$0x3]
    %v48 = vmul.f32 %v43, %v45
    %v49 = vmul.f32 %v44, %v46
    %v52 = vcombine.high %v48, %v48
    %v54 = vunpack.c.l.s4 1983009808
    %v55 = vunpack.c.0.s8 %v54
    %v56 = vlaneseq
    %v57 = vshrl.u32 %v56, 7
    %v58 = vsub.s32 %v55, %v57
    %v59 = vrot.slane %v48, %v58
    %v61 = vunpack.c.l.s4 1983009808
    %v62 = vunpack.c.0.s8 %v61
    %v63 = vlaneseq
    %v64 = vshrl.u32 %v63, 7
    %v65 = vsub.s32 %v62, %v64
    %v66 = vrot.slane %v52, %v65
    %v67 = vcombine.high %v59, %v59
    %v68 = vcombine.high %v66, %v66
    %v69 = vcombine.high %v49, %v49
    %v71 = vunpack.c.l.s4 1983009808
    %v72 = vunpack.c.0.s8 %v71
    %v73 = vlaneseq
    %v74 = vshrl.u32 %v73, 7
    %v75 = vsub.s32 %v72, %v74
    %v76 = vrot.slane %v49, %v75
    %v78 = vunpack.c.l.s4 1983009808
    %v79 = vunpack.c.0.s8 %v78
    %v80 = vlaneseq
    %v81 = vshrl.u32 %v80, 7
    %v82 = vsub.s32 %v79, %v81
    %v83 = vrot.slane %v69, %v82
    %v84 = vcombine.high %v76, %v76
    %v85 = vcombine.high %v83, %v83
    %vm94 = vcmask 1041408
    %v95 = vsel %vm94, %v59, 0.0
    %v96 = vsel %vm94, %v67, 0.0
    %v97 = vadd.f32 %v95, %v96
    %v98 = vsel %vm94, %v66, 0.0
    %v99 = vadd.f32 %v97, %v98
    %v100 = vsel %vm94, %v68, 0.0
    %v101 = vadd.f32 %v99, %v100
    %v102 = vsel %vm94, %v76, 0.0
    %v103 = vadd.f32 %v101, %v102
    %v104 = vsel %vm94, %v84, 0.0
    %v105 = vadd.f32 %v103, %v104
    %v106 = vsel %vm94, %v83, 0.0
    %v107 = vadd.f32 %v105, %v106
    %v108 = vsel %vm94, %v85, 0.0
    %v109 = vadd.f32 %v107, %v108
    %110 = vadd.xlane.f32.xlu0 %v109
    %v111 = vpop.xlane.xlu0 %110
    %v112 = vadd.f32 %v47, %v111
    %vm113 = vcmask 1024
    %114 = vst.msk [vmem:[#allocation2] sm:$0x3] %vm113, %v112
    %v115 = vld [vmem:[#allocation3] sm:$0x3]
    %v116 = vadd.f32 %v43, %v45
    %v117 = vadd.f32 %v44, %v46
    %v120 = vcombine.high %v116, %v116
    %v122 = vunpack.c.l.s4 1983009808
    %v123 = vunpack.c.0.s8 %v122
    %v124 = vlaneseq
    %v125 = vshrl.u32 %v124, 7
    %v126 = vsub.s32 %v123, %v125
    %v127 = vrot.slane %v116, %v126
    %v129 = vunpack.c.l.s4 1983009808
    %v130 = vunpack.c.0.s8 %v129
    %v131 = vlaneseq
    %v132 = vshrl.u32 %v131, 7
    %v133 = vsub.s32 %v130, %v132
    %v134 = vrot.slane %v120, %v133
    %v135 = vcombine.high %v127, %v127
    %v136 = vcombine.high %v134, %v134
    %v137 = vcombine.high %v117, %v117
    %v139 = vunpack.c.l.s4 1983009808
    %v140 = vunpack.c.0.s8 %v139
    %v141 = vlaneseq
    %v142 = vshrl.u32 %v141, 7
    %v143 = vsub.s32 %v140, %v142
    %v144 = vrot.slane %v117, %v143
    %v146 = vunpack.c.l.s4 1983009808
    %v147 = vunpack.c.0.s8 %v146
    %v148 = vlaneseq
    %v149 = vshrl.u32 %v148, 7
    %v150 = vsub.s32 %v147, %v149
    %v151 = vrot.slane %v137, %v150
    %v152 = vcombine.high %v144, %v144
    %v153 = vcombine.high %v151, %v151
    %v162 = vsel %vm94, %v127, 0.0
    %v163 = vsel %vm94, %v135, 0.0
    %v164 = vadd.f32 %v162, %v163
    %v165 = vsel %vm94, %v134, 0.0
    %v166 = vadd.f32 %v164, %v165
    %v167 = vsel %vm94, %v136, 0.0
    %v168 = vadd.f32 %v166, %v167
    %v169 = vsel %vm94, %v144, 0.0
    %v170 = vadd.f32 %v168, %v169
    %v171 = vsel %vm94, %v152, 0.0
    %v172 = vadd.f32 %v170, %v171
    %v173 = vsel %vm94, %v151, 0.0
    %v174 = vadd.f32 %v172, %v173
    %v175 = vsel %vm94, %v153, 0.0
    %v176 = vadd.f32 %v174, %v175
    %177 = vadd.xlane.f32.xlu0 %v176
    %v178 = vpop.xlane.xlu0 %177
    %v179 = vadd.f32 %v115, %v178
    %180 = vst.msk [vmem:[#allocation3] sm:$0x3] %vm113, %v179
    // Predicated region
    $region22: #{tpu_custom_call.1} parent=1 // pred_check
      %p181 = pneg %p36
    $region23: #{tpu_custom_call.1} parent=1 // pred_check_branch
      %183 = sbr.rel (%p181) target = $region25
    $region24: #{tpu_custom_call.1} parent=1 // pred_region
      %v184 = vld [vmem:[#allocation2] sm:$0x3]
      %v185 = vmul.f32 %v184, 2000.0
      %v186 = vadd.f32 %v185, 1.0
      %v187 = vld [vmem:[#allocation3] sm:$0x3]
      %v188 = vadd.f32 %v187, 1.0
      %v189 = vrcp.pop %v188
      %v190 = vmul.f32 %v186, %v189
      %v191 = vsel %vm113, %v190, 0.0
      %192 = vadd.xlane.f32.xlu0 %v191
      %v193 = vpop.xlane.xlu0 %192
      %v194 = vrot.slane %v193, 4
      %v195 = vadd.f32 %v193, %v194
      %v196 = vrot.slane %v195, 2
      %v197 = vadd.f32 %v195, %v196
      %v198 = vrot.slane %v197, 1
      %v199 = vadd.f32 %v197, %v198
      %s200 = vtos %v199
      %v201 = vrcp.pop 2.0
      %s202 = vtos %v201
      %s203 = smul.f32 %s200, %s202
      %s204 = ssub.f32 1.0, %s203
      %s205 = scalar_lea.smem [#allocation9], 0
      %206 = sst [smem:[%s205]] %s204
    $region25: #{tpu_custom_call.1} parent=1 // pred_fallthru
      _
    // Predicated region
    $region26: #{tpu_custom_call.1} parent=1 // pred_check
      _
    $region27: #{tpu_custom_call.1} parent=1 // pred_check_branch
      %208 = sbr.rel (0) target = $region29
    $region28: #{tpu_custom_call.1} parent=1 // pred_region
      %s210 = ssub.s32 16, 16
      %211 = vsyncadd [#allocation6], %s210
      %214 = dma.smem_to_hbm [#allocation9], 16, %s2, [#allocation6]
    $region29: #{tpu_custom_call.1} parent=1 // pred_fallthru
      _
    // Predicated region
    $region30: #{tpu_custom_call.1} parent=1 // pred_check
      _
    $region31: #{tpu_custom_call.1} parent=1 // pred_check_branch
      %216 = sbr.rel (0) target = $region33
    $region32: #{tpu_custom_call.1} parent=1 // pred_region
      %217 = dma.done [#allocation6], 16
    $region33: #{tpu_custom_call.1} parent=1 // pred_fallthru
      _
    %218 = sfence
    %219 = vsyncpa [#allocation5], 1
    %220 = vsyncpa [#allocation8], 1
    %221 = vsyncpa [#allocation6], 1

</llo_original>
